<compile_context>
chip_gen: v7x
topology: tpu7x:2x2x1
jax: 0.10.0
libtpu: 0.0.40
codegen_flags: <defaults>
</compile_context>

<pallas_src>
import math

import jax
import jax.numpy as jnp
from jax.experimental import pallas as pl
from jax.experimental.pallas import tpu as pltpu

EPS = 1e-6  # module default


def _layernorm_kernel(eps, x_ref, g_ref, b_ref, o_ref):
    x = x_ref[...].astype(jnp.float32)            # (block_rows, D) — lane-dense vregs
    d = x.shape[-1]

    mean = jnp.mean(x, axis=-1, keepdims=True)     # XLU cross-lane reduce
    diff = x - mean
    # torch.std uses the unbiased estimator (ddof = 1).  (features == 1 is
    # degenerate here exactly as it is for torch.std.)
    var = jnp.sum(diff * diff, axis=-1, keepdims=True) * (1.0 / (d - 1))
    std = jnp.sqrt(var)
    # Exact reciprocal: one divide per row on a (rows, 1) vector, then a
    # broadcast multiply.  The approx EUP reciprocal was not accurate enough.
    inv = 1.0 / (std + eps)

    out = g_ref[...] * (diff * inv) + b_ref[...]   # (1, D) broadcasts over rows
    o_ref[...] = out.astype(o_ref.dtype)           # full-width unmasked store


def _round_up(x, m):
    return (x + m - 1) // m * m


def layer_norm(x, gamma, beta, *, eps=EPS, block_rows=None):
    """LayerNorm over the last dim of x. gamma/beta have shape (features,)."""
    features = x.shape[-1]
    lead = x.shape[:-1]
    rows = math.prod(lead) if lead else 1

    x2 = x.reshape(rows, features)
    g2 = gamma.reshape(1, features).astype(jnp.float32)
    b2 = beta.reshape(1, features).astype(jnp.float32)

    itemsize = jnp.dtype(x2.dtype).itemsize
    # Sublane packing granularity: 8 rows (32-bit), 16 (16-bit), 32 (8-bit).
    gran = {4: 8, 2: 16, 1: 32}.get(itemsize, 8)

    if block_rows is None:
        # Byte-budget tiling: ~2 MiB per block.  Double-buffered input + output
        # is then ~8 MiB, comfortably inside the scoped-VMEM defaults on
        # v5e (16 MiB) / v6e / v7x (32 MiB) and v7x's 64 MiB physical VMEM,
        # while being large enough to run near the HBM roofline.
        budget = 2 * 1024 * 1024
        row_bytes = max(features * itemsize, 1)
        block_rows = max(gran, (budget // row_bytes) // gran * gran)

    if block_rows >= rows:
        block_rows = rows                    # full-extent block — always legal
    else:
        block_rows = _round_up(block_rows, gran)

    grid = (pl.cdiv(rows, block_rows),)      # partial last block is masked

    # Explicit scoped-VMEM limit consistent with the tile (double-buffered
    # input + output blocks, gamma/beta, ~2x headroom), clamped to a range
    # that is safe on all of v5e / v6e / v7x.
    block_bytes = block_rows * features * itemsize
    footprint = 2 * 2 * block_bytes + 2 * features * 4
    vmem_limit = int(min(max(2 * footprint, 16 << 20), 64 << 20))

    cost = pl.CostEstimate(
        flops=10 * rows * features,
        transcendentals=2 * rows,                       # sqrt + divide per row
        bytes_accessed=2 * rows * features * itemsize + 2 * features * 4,
    )

    kernel = lambda *refs: _layernorm_kernel(eps, *refs)

    out2 = pl.pallas_call(
        kernel,
        out_shape=jax.ShapeDtypeStruct((rows, features), x.dtype),
        grid_spec=pltpu.PrefetchScalarGridSpec(
            num_scalar_prefetch=0,
            grid=grid,
            in_specs=[
                pl.BlockSpec((block_rows, features), lambda i: (i, 0)),  # x rows
                pl.BlockSpec((1, features), lambda i: (0, 0)),           # a2 (gamma)
                pl.BlockSpec((1, features), lambda i: (0, 0)),           # b2 (beta)
            ],
            out_specs=pl.BlockSpec((block_rows, features), lambda i: (i, 0)),
        ),
        compiler_params=pltpu.CompilerParams(
            dimension_semantics=("parallel",),
            vmem_limit_bytes=vmem_limit,
        ),
        cost_estimate=cost,
    )(x2, g2, b2)

    return out2.reshape(x.shape)


def _reference_layer_norm(x, gamma, beta, eps=EPS):
    mean = jnp.mean(x, axis=-1, keepdims=True)
    std = jnp.std(x, axis=-1, keepdims=True, ddof=1)   # unbiased, like torch.std
    return gamma * (x - mean) / (std + eps) + beta


if __name__ == "__main__":
    key = jax.random.PRNGKey(0)
    B, S, D = 2, 8, 128  # batch, sequence, features (d_model)

    kx, kg, kb = jax.random.split(key, 3)
    x = jax.random.normal(kx, (B, S, D), dtype=jnp.float32)
    # Non-trivial affine params so the scale/shift path is actually exercised.
    gamma = jnp.ones((D,), jnp.float32) + 0.1 * jax.random.normal(kg, (D,), jnp.float32)
    beta = 0.1 * jax.random.normal(kb, (D,), jnp.float32)

    out = jax.jit(layer_norm)(x, gamma, beta)
    jax.block_until_ready(out)

    ref = _reference_layer_norm(x, gamma, beta)
    assert out.shape == x.shape and out.dtype == x.dtype
    assert bool(jnp.all(jnp.isfinite(out)))
    err1 = float(jnp.max(jnp.abs(out - ref)))
    assert err1 < 1e-3, f"max abs error vs reference: {err1}"

    # Also exercise the multi-step pipelined grid, including a masked partial
    # last block: 40 rows with forced 16-row blocks -> grid = (3,).
    x2 = jax.random.normal(jax.random.PRNGKey(1), (4, 10, D), dtype=jnp.float32)
    out2 = jax.jit(lambda a, g, b: layer_norm(a, g, b, block_rows=16))(x2, gamma, beta)
    jax.block_until_ready(out2)
    ref2 = _reference_layer_norm(x2, gamma, beta)
    err2 = float(jnp.max(jnp.abs(out2 - ref2)))
    assert err2 < 1e-3, f"max abs error vs reference (tiled path): {err2}"

    print("KERNEL_OK")
</pallas_src>

<mosaic_0001>
module attributes {stable_mosaic.version = 11 : i64} {
  func.func @_lambda_(%arg0: i32, %arg1: memref<16x128xf32, #tpu.memory_space<vmem>>, %arg2: memref<1x128xf32, #tpu.memory_space<vmem>>, %arg3: memref<1x128xf32, #tpu.memory_space<vmem>>, %arg4: memref<16x128xf32, #tpu.memory_space<vmem>>) attributes {dimension_semantics = [#tpu.dimension_semantics<parallel>], iteration_bounds = array<i64: 1>, scalar_prefetch = 0 : i64, scratch_operands = 0 : i64, tpu.core_type = #tpu.core_type<tc>, window_params = [{transform_indices = @transform_0, window_bounds = array<i64: 16, 128>}, {pipeline_mode = #tpu.pipeline_mode<synchronous>, transform_indices = @transform_1, window_bounds = array<i64: 1, 128>}, {pipeline_mode = #tpu.pipeline_mode<synchronous>, transform_indices = @transform_2, window_bounds = array<i64: 1, 128>}, {transform_indices = @transform_3, window_bounds = array<i64: 16, 128>}]} {
    %c0 = arith.constant 0 : index
    %c0_0 = arith.constant 0 : index
    %0 = vector.load %arg1[%c0, %c0_0] : memref<16x128xf32, #tpu.memory_space<vmem>>, vector<16x128xf32>
    %cst = arith.constant dense<0.000000e+00> : vector<16xf32>
    %1 = vector.multi_reduction <add>, %0, %cst [1] : vector<16x128xf32> to vector<16xf32>
    %2 = vector.shape_cast %1 : vector<16xf32> to vector<16x1xf32>
    %cst_1 = arith.constant 1.280000e+02 : f32
    %3 = vector.broadcast %cst_1 : f32 to vector<16x1xf32>
    %4 = arith.divf %2, %3 : vector<16x1xf32>
    %5 = vector.broadcast %4 : vector<16x1xf32> to vector<16x128xf32>
    %6 = arith.subf %0, %5 : vector<16x128xf32>
    %7 = arith.mulf %6, %6 : vector<16x128xf32>
    %cst_2 = arith.constant dense<0.000000e+00> : vector<16xf32>
    %8 = vector.multi_reduction <add>, %7, %cst_2 [1] : vector<16x128xf32> to vector<16xf32>
    %9 = vector.shape_cast %8 : vector<16xf32> to vector<16x1xf32>
    %cst_3 = arith.constant 0.00787401571 : f32
    %10 = vector.broadcast %cst_3 : f32 to vector<16x1xf32>
    %11 = arith.mulf %9, %10 : vector<16x1xf32>
    %12 = math.sqrt %11 : vector<16x1xf32>
    %cst_4 = arith.constant 9.99999997E-7 : f32
    %13 = vector.broadcast %cst_4 : f32 to vector<16x1xf32>
    %14 = arith.addf %12, %13 : vector<16x1xf32>
    %cst_5 = arith.constant 1.000000e+00 : f32
    %15 = vector.broadcast %cst_5 : f32 to vector<16x1xf32>
    %16 = arith.divf %15, %14 : vector<16x1xf32>
    %c0_6 = arith.constant 0 : index
    %c0_7 = arith.constant 0 : index
    %17 = vector.load %arg2[%c0_6, %c0_7] : memref<1x128xf32, #tpu.memory_space<vmem>>, vector<1x128xf32>
    %18 = vector.broadcast %16 : vector<16x1xf32> to vector<16x128xf32>
    %19 = arith.mulf %6, %18 : vector<16x128xf32>
    %20 = vector.broadcast %17 : vector<1x128xf32> to vector<16x128xf32>
    %21 = arith.mulf %20, %19 : vector<16x128xf32>
    %c0_8 = arith.constant 0 : index
    %c0_9 = arith.constant 0 : index
    %22 = vector.load %arg3[%c0_8, %c0_9] : memref<1x128xf32, #tpu.memory_space<vmem>>, vector<1x128xf32>
    %23 = vector.broadcast %22 : vector<1x128xf32> to vector<16x128xf32>
    %24 = arith.addf %21, %23 : vector<16x128xf32>
    %c0_10 = arith.constant 0 : index
    %c0_11 = arith.constant 0 : index
    %25 = vector.load %arg4[%c0_10, %c0_11] : memref<16x128xf32, #tpu.memory_space<vmem>>, vector<16x128xf32>
    tpu.vector_store %arg4[%c0_10, %c0_11], %24 {strides = array<i32>} : memref<16x128xf32, #tpu.memory_space<vmem>>, vector<16x128xf32>,
    return
  }
  func.func @transform_0(%arg0: i32) -> (i32, i32) {
    %c0_i32 = arith.constant 0 : i32
    %c0_i32_0 = arith.constant 0 : i32
    return %arg0, %c0_i32 : i32, i32
  }
  func.func @transform_1(%arg0: i32) -> (i32, i32) {
    %c0_i32 = arith.constant 0 : i32
    %c0_i32_0 = arith.constant 0 : i32
    %c0_i32_1 = arith.constant 0 : i32
    return %c0_i32, %c0_i32_0 : i32, i32
  }
  func.func @transform_2(%arg0: i32) -> (i32, i32) {
    %c0_i32 = arith.constant 0 : i32
    %c0_i32_0 = arith.constant 0 : i32
    %c0_i32_1 = arith.constant 0 : i32
    return %c0_i32, %c0_i32_0 : i32, i32
  }
  func.func @transform_3(%arg0: i32) -> (i32, i32) {
    %c0_i32 = arith.constant 0 : i32
    %c0_i32_0 = arith.constant 0 : i32
    return %arg0, %c0_i32 : i32, i32
  }
}

</mosaic_0001>

<llo_original>
// kernel: layer_norm.1
$region0: #{layer_norm.1}
  #allocation0 [shape = 'u32[]', space=smem, size = 0x4, offset = 0x4, fixed_abs, tag = 'smem constant byte address 0x4 - core index']
  #allocation1 [shape = 'u32[144,128]{1,0:T(1,128)}', space=vmem, size = 0x12000, scoped, tag = 'internal scratch']
  %s0 = inlined_call_operand.hbm [shape: f32[16,128], index: 0, kind: input, shape index: {}]
  %s1 = inlined_call_operand.vmem [shape: f32[1,128], index: 1, kind: input, shape index: {}]
  %s2 = inlined_call_operand.vmem [shape: f32[1,128], index: 2, kind: input, shape index: {}]
  %s3 = inlined_call_operand.hbm [shape: f32[16,128], index: 3, kind: output, shape index: {}]
  %s4 = sld [smem:[#allocation0]]
  $region26: #{layer_norm.1} parent=0
    _
  %s6 = ssub.s32 1, %s4
  %s7 = scalar_select 0, %s6, %s4
  $region1: #{layer_norm.1} parent=0
    #allocation2 [shape = 'u8[8192]{0}', space=vmem, size = 0x2000, scoped, tag = 'input window, operand 0, single buffered']
    #allocation3 [shape = 's32[1]{0}', space=sflag, size = 0x4, scoped, tag = 'scoped memory for layer_norm.1']
    #allocation4 [shape = 's32[1]{0}', space=sflag, size = 0x4, scoped, tag = 'scoped memory for layer_norm.1']
    #allocation5 [shape = 'u8[8192]{0}', space=vmem, size = 0x2000, scoped, tag = 'output window, operand 0, single buffered']
    %8 = vsyncpa [#allocation3], 0
    %9 = vsyncpa [#allocation4], 0
    // Predicated region
    $region2: #{layer_norm.1} parent=1 // pred_check
      _
    $region3: #{layer_norm.1} parent=1 // pred_check_branch
      %11 = sbr.rel (0) target = $region5
    $region4: #{layer_norm.1} parent=1 // pred_region
      %s13 = ssub.s32 256, 256
      %14 = vsyncadd [#allocation3], %s13
      %s15 = sshll.u32 [#allocation2], 4
      %s16 = int_to_ptr.vmem [resolvable:$true] %s15
      %21 = dma.hbm_to_vmem [thread:$0]  %s0, 256, %s16, [#allocation3], 128, 128, 8
    $region5: #{layer_norm.1} parent=1 // pred_fallthru
      _
    // Predicated region
    $region6: #{layer_norm.1} parent=1 // pred_check
      _
    $region7: #{layer_norm.1} parent=1 // pred_check_branch
      %23 = sbr.rel (0) target = $region9
    $region8: #{layer_norm.1} parent=1 // pred_region
      _
    $region9: #{layer_norm.1} parent=1 // pred_fallthru
      _
    // Predicated region
    $region10: #{layer_norm.1} parent=1 // pred_check
      _
    $region11: #{layer_norm.1} parent=1 // pred_check_branch
      %25 = sbr.rel (0) target = $region13
    $region12: #{layer_norm.1} parent=1 // pred_region
      _
    $region13: #{layer_norm.1} parent=1 // pred_fallthru
      _
    // Predicated region
    $region14: #{layer_norm.1} parent=1 // pred_check
      _
    $region15: #{layer_norm.1} parent=1 // pred_check_branch
      %27 = sbr.rel (0) target = $region17
    $region16: #{layer_norm.1} parent=1 // pred_region
      %28 = dma.done [#allocation3], 256
    $region17: #{layer_norm.1} parent=1 // pred_fallthru
      _
    %v29 = vld [vmem:[#allocation2] sm:$0xff]
    %v30 = vld [vmem:[#allocation2 + $0x8] sm:$0xff]
    %31 = vadd.xlane.f32.xlu0 %v29
    %v32 = vpop.xlane.xlu0 %31
    %33 = vadd.xlane.f32.xlu0 %v30
    %v34 = vpop.xlane.xlu0 %33
    %v35 = vrcp.pop 128.0
    %v36 = vmul.f32 %v32, %v35
    %v37 = vmul.f32 %v34, %v35
    %v38 = vsub.f32 %v29, %v36
    %v39 = vsub.f32 %v30, %v37
    %v40 = vmul.f32 %v38, %v38
    %v41 = vmul.f32 %v39, %v39
    %42 = vadd.xlane.f32.xlu0 %v40
    %v43 = vpop.xlane.xlu0 %42
    %44 = vadd.xlane.f32.xlu0 %v41
    %v45 = vpop.xlane.xlu0 %44
    %v46 = vmul.f32 %v43, 0.007874016
    %v47 = vmul.f32 %v45, 0.007874016
    %v48 = vrsqrt.pop %v46
    %v49 = vmul.f32 %v46, %v48
    %vm50 = vcmp.eq.f32.partialorder %v46, inf
    %v51 = vsel %vm50, %v46, %v49
    %vm52 = vcmp.eq.f32.partialorder %v46, 0.0
    %v53 = vand.u32 %v46, 2147483648
    %v54 = vsel %vm52, %v53, %v51
    %v55 = vrsqrt.pop %v47
    %v56 = vmul.f32 %v47, %v55
    %vm57 = vcmp.eq.f32.partialorder %v47, inf
    %v58 = vsel %vm57, %v47, %v56
    %vm59 = vcmp.eq.f32.partialorder %v47, 0.0
    %v60 = vand.u32 %v47, 2147483648
    %v61 = vsel %vm59, %v60, %v58
    %v62 = vadd.f32 %v54, 1e-06
    %v63 = vadd.f32 %v61, 1e-06
    %v64 = vrcp.pop %v62
    %v65 = vmul.f32 1.0, %v64
    %v66 = vrcp.pop %v63
    %v67 = vmul.f32 1.0, %v66
    %v68 = vld [vmem:[%s1] sm:$0x1]
    %v69 = vmul.f32 %v38, %v65
    %v70 = vmul.f32 %v39, %v67
    %v72 = vlaneseq
    %v73 = vshrl.u32 %v72, 7
    %v74 = vsub.s32 0, %v73
    %v75 = vrot.slane %v68, %v74
    %v77 = vmul.f32 %v75, %v69
    %v78 = vmul.f32 %v75, %v70
    %v79 = vld [vmem:[%s2] sm:$0x1]
    %v81 = vlaneseq
    %v82 = vshrl.u32 %v81, 7
    %v83 = vsub.s32 0, %v82
    %v84 = vrot.slane %v79, %v83
    %v86 = vadd.f32 %v77, %v84
    %v87 = vadd.f32 %v78, %v84
    %88 = vst [vmem:[#allocation5] sm:$0xff] %v86
    %89 = vst [vmem:[#allocation5 + $0x8] sm:$0xff] %v87
    // Predicated region
    $region18: #{layer_norm.1} parent=1 // pred_check
      _
    $region19: #{layer_norm.1} parent=1 // pred_check_branch
      %91 = sbr.rel (0) target = $region21
    $region20: #{layer_norm.1} parent=1 // pred_region
      %s93 = ssub.s32 256, 256
      %94 = vsyncadd [#allocation4], %s93
      %s95 = sshll.u32 [#allocation5], 4
      %s96 = int_to_ptr.vmem [resolvable:$true] %s95
      %101 = dma.vmem_to_hbm [thread:$0]  %s96, 256, %s3, [#allocation4], 128, 128, 8
    $region21: #{layer_norm.1} parent=1 // pred_fallthru
      _
    // Predicated region
    $region22: #{layer_norm.1} parent=1 // pred_check
      _
    $region23: #{layer_norm.1} parent=1 // pred_check_branch
      %103 = sbr.rel (0) target = $region25
    $region24: #{layer_norm.1} parent=1 // pred_region
      %104 = dma.done [#allocation4], 256
    $region25: #{layer_norm.1} parent=1 // pred_fallthru
      _
    %105 = vsyncpa [#allocation3], 1
    %106 = vsyncpa [#allocation4], 1

</llo_original>
